<compile_context>
chip_gen: v5e
topology: v5e:2x2
jax: 0.10.0
libtpu: 0.0.40
codegen_flags: <defaults>
</compile_context>

<pallas_src>
import functools

import numpy as np
import jax
import jax.numpy as jnp
from jax.experimental import pallas as pl
from jax.experimental.pallas import tpu as pltpu


# bf16 MXU operands (f32 accumulation).  Set to jnp.float32 to disable the cast.
GEMM_OPERAND_DTYPE = jnp.bfloat16


# ------------------------------- Pallas kernel -------------------------------

def _fused_decoder_kernel(n_inter, houts, *refs):
    """Whole decoder forward for ONE batch element (grid=(batch,)).

    refs = [x_pad,                                    # (H0+2, W0*C0) f32, H replicate-padded
            (Bcat, bias, scale, shift) * n_inter,     # eval-BN + ReLU + skip blocks
            Bcat_last, fc_fold, fc_bias,              # last block (2*conv) + pool + FC folded
            out,                                      # (1, ncls_pad)
            act_pad_0 .. act_pad_{n_inter-1}]         # VMEM scratch: H-padded activations
    """
    n_in = 1 + 4 * n_inter + 3
    o_ref = refs[n_in]
    act_scratch = refs[n_in + 1:]

    def conv_gemm(src, hout, b_ref):
        # Stride-2 / replicate-pad-H row gather via strided sublane loads; the three kh
        # taps are stacked on the lane (contraction) axis -> one MXU GEMM per block.
        taps = jnp.concatenate(
            [src[pl.ds(kh, hout, stride=2), :] for kh in range(3)], axis=-1)
        return jnp.dot(taps.astype(b_ref.dtype), b_ref[...],
                       preferred_element_type=jnp.float32)

    src = refs[0]
    pos = 1
    for i in range(n_inter):
        b_ref, bias_ref, scale_ref, shift_ref = refs[pos:pos + 4]
        pos += 4
        hout = houts[i]
        y = conv_gemm(src, hout, b_ref) + bias_ref[...]                    # conv + bias
        act = jnp.maximum(y * scale_ref[...] + shift_ref[...], 0.0) + y    # ReLU(BN(y)) + y
        # Write back with duplicated edge rows (replicate pad along H for the next block).
        dst = act_scratch[i]
        dst[pl.ds(1, hout), :] = act
        dst[pl.ds(0, 1), :] = act[:1]
        dst[pl.ds(hout + 1, 1), :] = act[hout - 1:hout]
        src = dst

    # Last ConvBlock (norm=None, act=None, skip=True => 2*conv) fused with global-avg-pool
    # and the FC: the 2x, 1/(Hout*Wout), column sum and fc weights live in fc_fold/fc_bias.
    b_ref, fcw_ref, fcb_ref = refs[pos:pos + 3]
    raw = conv_gemm(src, houts[n_inter], b_ref)                 # (Hout, Wout*Cout) f32
    rowsum = jnp.sum(raw, axis=0, keepdims=True)                # pool row-sum (1, Wout*Cout)
    logits = jnp.dot(rowsum, fcw_ref[...],
                     preferred_element_type=jnp.float32) + fcb_ref[...]
    o_ref[...] = logits.astype(o_ref.dtype)


# -------------------- host-side constant (weight) folding --------------------

def _build_col_weight_cat(w_hwio, w_in):
    """Bcat[(kh,w,ci), (ow,co)] = sum_kw 1[w == clamp(2*ow+kw-1, 0, w_in-1)] * W[kh,kw,ci,co].

    Folds the stride-2 column selection, the replicate pad along W and the conv weights
    into ONE GEMM operand; the three kh taps are stacked on the contraction axis."""
    _, _, cin, cout = w_hwio.shape
    w_out = w_in // 2
    w_np = np.asarray(w_hwio, np.float32)
    b = np.zeros((3, w_in * cin, w_out * cout), np.float32)
    for kh in range(3):
        for ow in range(w_out):
            for kw in range(3):
                wsrc = min(max(2 * ow + kw - 1, 0), w_in - 1)
                b[kh, wsrc * cin:(wsrc + 1) * cin, ow * cout:(ow + 1) * cout] += w_np[kh, kw]
    return b.reshape(3 * w_in * cin, w_out * cout)


def prepare_fused_params(params, img_size):
    """One-time folding of conv/BN/bias/pool/FC params into device-resident GEMM operands.
    Called once (outside jit, outside the hot path); batch-independent."""
    blocks = params["blocks"]
    n_inter = len(blocks) - 1
    ops, houts = [], []
    h = img_size
    for blk in blocks[:n_inter]:
        w = np.asarray(blk["w"], np.float32)                       # (3,3,Cin,Cout) HWIO
        w_out = h // 2
        houts.append(w_out)
        bias_t = np.tile(np.asarray(blk["b"], np.float32).reshape(-1), w_out)[None, :]
        scale_t = np.tile(np.asarray(blk["scale"], np.float32).reshape(-1), w_out)[None, :]
        shift_t = np.tile(np.asarray(blk["shift"], np.float32).reshape(-1), w_out)[None, :]
        ops += [jnp.asarray(_build_col_weight_cat(w, h), dtype=GEMM_OPERAND_DTYPE),
                jnp.asarray(bias_t), jnp.asarray(scale_t), jnp.asarray(shift_t)]
        h = w_out

    # Last block: out = 2*(conv+bias); pooled = mean_{oh,ow}; logits = pooled@fc_w + fc_b.
    blk = blocks[-1]
    w = np.asarray(blk["w"], np.float32)
    b_last = np.asarray(blk["b"], np.float32).reshape(-1)           # (Cout,)
    fc_w = np.asarray(params["fc_w"], np.float32)                    # (Cout, ncls)
    fc_b = np.asarray(params["fc_b"], np.float32).reshape(1, -1)     # (1, ncls)
    h_out = h // 2
    w_out = h // 2
    houts.append(h_out)
    ncls = fc_w.shape[1]
    ncls_pad = ((ncls + 127) // 128) * 128                           # lane-dense FC output
    fc_fold = np.zeros((w_out * fc_w.shape[0], ncls_pad), np.float32)
    fc_fold[:, :ncls] = np.tile(fc_w, (w_out, 1)) * (2.0 / (h_out * w_out))
    fcb_fold = np.zeros((1, ncls_pad), np.float32)
    fcb_fold[:, :ncls] = fc_b + 2.0 * (b_last @ fc_w)[None, :]
    ops += [jnp.asarray(_build_col_weight_cat(w, h), dtype=GEMM_OPERAND_DTYPE),
            jnp.asarray(fc_fold), jnp.asarray(fcb_fold)]
    return n_inter, tuple(houts), tuple(ops)


# --------------------------------- forward -----------------------------------

@functools.partial(jax.jit, static_argnames=("n_inter", "houts", "num_classes"))
def _decoder_forward(x_nchw, ops, *, n_inter, houts, num_classes):
    batch, _, img_size, _ = x_nchw.shape
    ncls_pad = ops[-1].shape[-1]

    # NCHW (PyTorch) -> NHWC, replicate-pad H once (the W pad is folded into Bcat),
    # flatten (W, C) onto the lane axis.
    x = jnp.transpose(x_nchw, (0, 2, 3, 1)).astype(jnp.float32)
    x = jnp.pad(x, ((0, 0), (1, 1), (0, 0), (0, 0)), mode="edge")
    x3d = x.reshape(batch, img_size + 2, -1)

    in_specs = [pl.BlockSpec((None, img_size + 2, x3d.shape[-1]), lambda n: (n, 0, 0))]
    # Folded constants are grid-invariant (block index (0,0) every step -> no re-DMA).
    in_specs += [pl.BlockSpec(op.shape, lambda n: (0, 0)) for op in ops]
    out_spec = pl.BlockSpec((None, 1, ncls_pad), lambda n: (n, 0, 0))
    # Replicate-padded intermediate activations live in per-core VMEM scratch.
    scratch = [pltpu.VMEM((houts[i] + 2, ops[4 * i].shape[1]), jnp.float32)
               for i in range(n_inter)]

    kernel = functools.partial(_fused_decoder_kernel, n_inter, houts)
    out = pl.pallas_call(
        kernel,
        out_shape=jax.ShapeDtypeStruct((batch, 1, ncls_pad), jnp.float32),
        grid_spec=pltpu.PrefetchScalarGridSpec(
            num_scalar_prefetch=0,
            grid=(batch,),
            in_specs=in_specs,
            out_specs=out_spec,
            scratch_shapes=scratch),
        compiler_params=pltpu.CompilerParams(
            dimension_semantics=("parallel",),           # v7x: 2 TCs split the batch
            vmem_limit_bytes=32 * 1024 * 1024),          # explicit (v5e default is 16 MiB)
    )(x3d, *ops)
    return out[:, 0, :num_classes]


def build_fused_decoder(params, img_size):
    """Fold the params ONCE (device-resident constants) and return a jitted forward(x)."""
    n_inter, houts, ops = prepare_fused_params(params, img_size)
    num_classes = int(params["fc_w"].shape[-1])

    def forward(x_nchw):
        return _decoder_forward(x_nchw, ops, n_inter=n_inter, houts=houts,
                                num_classes=num_classes)
    return forward


# --------------------------- deterministic params -----------------------------

def init_params(key, img_size, in_channels, num_classes):
    n_layers = int(np.log2(img_size // 16)) + 1
    kernel_list = [in_channels * 2 ** i for i in range(n_layers)]
    chans = list(zip(kernel_list[:-1], kernel_list[1:])) + [(kernel_list[-1], kernel_list[-1])]
    eps = 1e-5
    blocks = []
    for idx, (cin, cout) in enumerate(chans):
        key, kw, kb, kg, kbt, km, kv = jax.random.split(key, 7)
        w = 0.1 * jax.random.normal(kw, (3, 3, cin, cout), jnp.float32)   # HWIO
        b = 0.1 * jax.random.normal(kb, (1, cout), jnp.float32)
        if idx < len(chans) - 1:
            gamma = 1.0 + 0.1 * jax.random.normal(kg, (cout,), jnp.float32)
            beta = 0.1 * jax.random.normal(kbt, (cout,), jnp.float32)
            rmean = 0.1 * jax.random.normal(km, (cout,), jnp.float32)
            rvar = 0.5 + jax.random.uniform(kv, (cout,), jnp.float32)
            scale = gamma / jnp.sqrt(rvar + eps)
            shift = beta - rmean * scale
        else:
            scale = jnp.ones((cout,), jnp.float32)
            shift = jnp.zeros((cout,), jnp.float32)
        blocks.append(dict(w=w, b=b, scale=scale.reshape(1, cout), shift=shift.reshape(1, cout)))
    key, kfw, kfb = jax.random.split(key, 3)
    c_last = kernel_list[-1]
    fc_w = 0.1 * jax.random.normal(kfw, (c_last, num_classes), jnp.float32)
    fc_b = 0.1 * jax.random.normal(kfb, (1, num_classes), jnp.float32)
    return dict(blocks=blocks, fc_w=fc_w, fc_b=fc_b)


# ----------------------------- pure-JAX reference ------------------------------

def reference_forward(x_nchw, params):
    x = jnp.transpose(x_nchw, (0, 2, 3, 1)).astype(jnp.float32)
    nb = len(params["blocks"])
    for i, blk in enumerate(params["blocks"]):
        xp = jnp.pad(x, ((0, 0), (1, 1), (1, 1), (0, 0)), mode="edge")
        conv = jax.lax.conv_general_dilated(
            xp, blk["w"], window_strides=(2, 2), padding="VALID",
            dimension_numbers=("NHWC", "HWIO", "NHWC"))
        conv = conv + blk["b"].reshape(1, 1, 1, -1)
        if i < nb - 1:
            x = jnp.maximum(conv * blk["scale"].reshape(1, 1, 1, -1)
                            + blk["shift"].reshape(1, 1, 1, -1), 0.0) + conv
        else:
            x = conv + conv
    pooled = jnp.mean(x, axis=(1, 2))
    return pooled @ params["fc_w"] + params["fc_b"]


# ------------------------------------ main -------------------------------------

if __name__ == "__main__":
    batch, in_channels, img_size, num_classes = 2, 4, 32, 3
    key = jax.random.PRNGKey(0)
    key, kx, kp = jax.random.split(key, 3)
    x = jax.random.normal(kx, (batch, in_channels, img_size, img_size), jnp.float32)
    params = init_params(kp, img_size, in_channels, num_classes)

    forward = build_fused_decoder(params, img_size)   # constants folded / uploaded ONCE
    logits = jax.block_until_ready(forward(x))

    ref = reference_forward(x, params)
    assert logits.shape == (batch, num_classes)
    # bf16 conv-GEMM operands (f32 accumulate) vs. the f32 XLA reference -> ~1e-3 noise.
    np.testing.assert_allclose(np.asarray(logits), np.asarray(ref), rtol=2e-2, atol=2e-2)
    print("KERNEL_OK")
</pallas_src>

<mosaic_0001>
module attributes {stable_mosaic.version = 11 : i64} {
  func.func @_fused_decoder_kernel(%arg0: i32, %arg1: memref<1x34x128xf32, #tpu.memory_space<vmem>>, %arg2: memref<384x128xbf16, #tpu.memory_space<vmem>>, %arg3: memref<1x128xf32, #tpu.memory_space<vmem>>, %arg4: memref<1x128xf32, #tpu.memory_space<vmem>>, %arg5: memref<1x128xf32, #tpu.memory_space<vmem>>, %arg6: memref<384x64xbf16, #tpu.memory_space<vmem>>, %arg7: memref<64x128xf32, #tpu.memory_space<vmem>>, %arg8: memref<1x128xf32, #tpu.memory_space<vmem>>, %arg9: memref<1x1x128xf32, #tpu.memory_space<vmem>>, %arg10: memref<18x128xf32, #tpu.memory_space<vmem>>) attributes {dimension_semantics = [#tpu.dimension_semantics<parallel>], iteration_bounds = array<i64: 2>, scalar_prefetch = 0 : i64, scratch_operands = 1 : i64, tpu.core_type = #tpu.core_type<tc>, window_params = [{transform_indices = @transform_0, window_bounds = array<i64: 1, 34, 128>}, {pipeline_mode = #tpu.pipeline_mode<synchronous>, transform_indices = @transform_1, window_bounds = array<i64: 384, 128>}, {pipeline_mode = #tpu.pipeline_mode<synchronous>, transform_indices = @transform_2, window_bounds = array<i64: 1, 128>}, {pipeline_mode = #tpu.pipeline_mode<synchronous>, transform_indices = @transform_3, window_bounds = array<i64: 1, 128>}, {pipeline_mode = #tpu.pipeline_mode<synchronous>, transform_indices = @transform_4, window_bounds = array<i64: 1, 128>}, {pipeline_mode = #tpu.pipeline_mode<synchronous>, transform_indices = @transform_5, window_bounds = array<i64: 384, 64>}, {pipeline_mode = #tpu.pipeline_mode<synchronous>, transform_indices = @transform_6, window_bounds = array<i64: 64, 128>}, {pipeline_mode = #tpu.pipeline_mode<synchronous>, transform_indices = @transform_7, window_bounds = array<i64: 1, 128>}, {transform_indices = @transform_8, window_bounds = array<i64: 1, 1, 128>}]} {
    %c0 = arith.constant 0 : index
    %c0_0 = arith.constant 0 : index
    %c0_1 = arith.constant 0 : index
    %0 = tpu.strided_load %arg1[%c0, %c0_0, %c0_1] {strides = array<i32: 1, 2, 1>} : memref<1x34x128xf32, #tpu.memory_space<vmem>>, vector<1x16x128xf32>
    %1 = vector.shape_cast %0 : vector<1x16x128xf32> to vector<16x128xf32>
    %c0_2 = arith.constant 0 : index
    %c1 = arith.constant 1 : index
    %c0_3 = arith.constant 0 : index
    %2 = tpu.strided_load %arg1[%c0_2, %c1, %c0_3] {strides = array<i32: 1, 2, 1>} : memref<1x34x128xf32, #tpu.memory_space<vmem>>, vector<1x16x128xf32>
    %3 = vector.shape_cast %2 : vector<1x16x128xf32> to vector<16x128xf32>
    %c0_4 = arith.constant 0 : index
    %c2 = arith.constant 2 : index
    %c0_5 = arith.constant 0 : index
    %4 = tpu.strided_load %arg1[%c0_4, %c2, %c0_5] {strides = array<i32: 1, 2, 1>} : memref<1x34x128xf32, #tpu.memory_space<vmem>>, vector<1x16x128xf32>
    %5 = vector.shape_cast %4 : vector<1x16x128xf32> to vector<16x128xf32>
    %6 = tpu.concatenate %1, %3, %5 in 1 : vector<16x128xf32>, vector<16x128xf32>, vector<16x128xf32> -> vector<16x384xf32>
    %7 = arith.truncf %6 : vector<16x384xf32> to vector<16x384xbf16>
    %c0_6 = arith.constant 0 : index
    %c0_7 = arith.constant 0 : index
    %8 = vector.load %arg2[%c0_6, %c0_7] : memref<384x128xbf16, #tpu.memory_space<vmem>>, vector<384x128xbf16>
    %cst = arith.constant dense<0.000000e+00> : vector<16x128xf32>
    %9 = tpu.matmul %7, %8, %cst {dimension_numbers = #tpu.dot_dimension_numbers<[1], [0], [0], [1], [0, 0, 1, 1], [], []>} : vector<16x384xbf16>, vector<384x128xbf16>, vector<16x128xf32> -> vector<16x128xf32>
    %c0_8 = arith.constant 0 : index
    %c0_9 = arith.constant 0 : index
    %10 = vector.load %arg3[%c0_8, %c0_9] : memref<1x128xf32, #tpu.memory_space<vmem>>, vector<1x128xf32>
    %11 = vector.broadcast %10 : vector<1x128xf32> to vector<16x128xf32>
    %12 = arith.addf %9, %11 : vector<16x128xf32>
    %c0_10 = arith.constant 0 : index
    %c0_11 = arith.constant 0 : index
    %13 = vector.load %arg4[%c0_10, %c0_11] : memref<1x128xf32, #tpu.memory_space<vmem>>, vector<1x128xf32>
    %14 = vector.broadcast %13 : vector<1x128xf32> to vector<16x128xf32>
    %15 = arith.mulf %12, %14 : vector<16x128xf32>
    %c0_12 = arith.constant 0 : index
    %c0_13 = arith.constant 0 : index
    %16 = vector.load %arg5[%c0_12, %c0_13] : memref<1x128xf32, #tpu.memory_space<vmem>>, vector<1x128xf32>
    %17 = vector.broadcast %16 : vector<1x128xf32> to vector<16x128xf32>
    %18 = arith.addf %15, %17 : vector<16x128xf32>
    %cst_14 = arith.constant 0.000000e+00 : f32
    %19 = vector.broadcast %cst_14 : f32 to vector<16x128xf32>
    %20 = arith.maximumf %18, %19 : vector<16x128xf32>
    %21 = arith.addf %20, %12 : vector<16x128xf32>
    %c1_15 = arith.constant 1 : index
    %c0_16 = arith.constant 0 : index
    %22 = vector.load %arg10[%c1_15, %c0_16] : memref<18x128xf32, #tpu.memory_space<vmem>>, vector<16x128xf32>
    tpu.vector_store %arg10[%c1_15, %c0_16], %21 {strides = array<i32>} : memref<18x128xf32, #tpu.memory_space<vmem>>, vector<16x128xf32>,
    %23 = vector.extract_strided_slice %21 {offsets = [0, 0], sizes = [1, 128], strides = [1, 1]} : vector<16x128xf32> to vector<1x128xf32>
    %c0_17 = arith.constant 0 : index
    %c0_18 = arith.constant 0 : index
    %24 = vector.load %arg10[%c0_17, %c0_18] : memref<18x128xf32, #tpu.memory_space<vmem>>, vector<1x128xf32>
    tpu.vector_store %arg10[%c0_17, %c0_18], %23 {strides = array<i32>} : memref<18x128xf32, #tpu.memory_space<vmem>>, vector<1x128xf32>,
    %25 = vector.extract_strided_slice %21 {offsets = [15, 0], sizes = [1, 128], strides = [1, 1]} : vector<16x128xf32> to vector<1x128xf32>
    %c17 = arith.constant 17 : index
    %c0_19 = arith.constant 0 : index
    %26 = vector.load %arg10[%c17, %c0_19] : memref<18x128xf32, #tpu.memory_space<vmem>>, vector<1x128xf32>
    tpu.vector_store %arg10[%c17, %c0_19], %25 {strides = array<i32>} : memref<18x128xf32, #tpu.memory_space<vmem>>, vector<1x128xf32>,
    %c0_20 = arith.constant 0 : index
    %c0_21 = arith.constant 0 : index
    %27 = tpu.strided_load %arg10[%c0_20, %c0_21] {strides = array<i32: 2, 1>} : memref<18x128xf32, #tpu.memory_space<vmem>>, vector<8x128xf32>
    %c1_22 = arith.constant 1 : index
    %c0_23 = arith.constant 0 : index
    %28 = tpu.strided_load %arg10[%c1_22, %c0_23] {strides = array<i32: 2, 1>} : memref<18x128xf32, #tpu.memory_space<vmem>>, vector<8x128xf32>
    %c2_24 = arith.constant 2 : index
    %c0_25 = arith.constant 0 : index
    %29 = tpu.strided_load %arg10[%c2_24, %c0_25] {strides = array<i32: 2, 1>} : memref<18x128xf32, #tpu.memory_space<vmem>>, vector<8x128xf32>
    %30 = tpu.concatenate %27, %28, %29 in 1 : vector<8x128xf32>, vector<8x128xf32>, vector<8x128xf32> -> vector<8x384xf32>
    %31 = arith.truncf %30 : vector<8x384xf32> to vector<8x384xbf16>
    %c0_26 = arith.constant 0 : index
    %c0_27 = arith.constant 0 : index
    %32 = vector.load %arg6[%c0_26, %c0_27] : memref<384x64xbf16, #tpu.memory_space<vmem>>, vector<384x64xbf16>
    %cst_28 = arith.constant dense<0.000000e+00> : vector<8x64xf32>
    %33 = tpu.matmul %31, %32, %cst_28 {dimension_numbers = #tpu.dot_dimension_numbers<[1], [0], [0], [1], [0, 0, 1, 1], [], []>} : vector<8x384xbf16>, vector<384x64xbf16>, vector<8x64xf32> -> vector<8x64xf32>
    %cst_29 = arith.constant dense<0.000000e+00> : vector<64xf32>
    %34 = vector.multi_reduction <add>, %33, %cst_29 [0] : vector<8x64xf32> to vector<64xf32>
    %35 = vector.shape_cast %34 : vector<64xf32> to vector<1x64xf32>
    %c0_30 = arith.constant 0 : index
    %c0_31 = arith.constant 0 : index
    %36 = vector.load %arg7[%c0_30, %c0_31] : memref<64x128xf32, #tpu.memory_space<vmem>>, vector<64x128xf32>
    %cst_32 = arith.constant dense<0.000000e+00> : vector<1x128xf32>
    %37 = tpu.matmul %35, %36, %cst_32 {dimension_numbers = #tpu.dot_dimension_numbers<[1], [0], [0], [1], [0, 0, 1, 1], [], []>} : vector<1x64xf32>, vector<64x128xf32>, vector<1x128xf32> -> vector<1x128xf32>
    %c0_33 = arith.constant 0 : index
    %c0_34 = arith.constant 0 : index
    %38 = vector.load %arg8[%c0_33, %c0_34] : memref<1x128xf32, #tpu.memory_space<vmem>>, vector<1x128xf32>
    %39 = arith.addf %37, %38 : vector<1x128xf32>
    %c0_35 = arith.constant 0 : index
    %c0_36 = arith.constant 0 : index
    %c0_37 = arith.constant 0 : index
    %40 = vector.load %arg9[%c0_35, %c0_36, %c0_37] : memref<1x1x128xf32, #tpu.memory_space<vmem>>, vector<1x1x128xf32>
    %41 = vector.shape_cast %40 : vector<1x1x128xf32> to vector<1x128xf32>
    %42 = vector.shape_cast %39 : vector<1x128xf32> to vector<1x1x128xf32>
    tpu.vector_store %arg9[%c0_35, %c0_36, %c0_37], %42 {strides = array<i32>} : memref<1x1x128xf32, #tpu.memory_space<vmem>>, vector<1x1x128xf32>,
    return
  }
  func.func @transform_0(%arg0: i32) -> (i32, i32, i32) {
    %c0_i32 = arith.constant 0 : i32
    %c0_i32_0 = arith.constant 0 : i32
    %c0_i32_1 = arith.constant 0 : i32
    return %arg0, %c0_i32, %c0_i32_0 : i32, i32, i32
  }
  func.func @transform_1(%arg0: i32) -> (i32, i32) {
    %c0_i32 = arith.constant 0 : i32
    %c0_i32_0 = arith.constant 0 : i32
    %c0_i32_1 = arith.constant 0 : i32
    return %c0_i32, %c0_i32_0 : i32, i32
  }
  func.func @transform_2(%arg0: i32) -> (i32, i32) {
    %c0_i32 = arith.constant 0 : i32
    %c0_i32_0 = arith.constant 0 : i32
    %c0_i32_1 = arith.constant 0 : i32
    return %c0_i32, %c0_i32_0 : i32, i32
  }
  func.func @transform_3(%arg0: i32) -> (i32, i32) {
    %c0_i32 = arith.constant 0 : i32
    %c0_i32_0 = arith.constant 0 : i32
    %c0_i32_1 = arith.constant 0 : i32
    return %c0_i32, %c0_i32_0 : i32, i32
  }
  func.func @transform_4(%arg0: i32) -> (i32, i32) {
    %c0_i32 = arith.constant 0 : i32
    %c0_i32_0 = arith.constant 0 : i32
    %c0_i32_1 = arith.constant 0 : i32
    return %c0_i32, %c0_i32_0 : i32, i32
  }
  func.func @transform_5(%arg0: i32) -> (i32, i32) {
    %c0_i32 = arith.constant 0 : i32
    %c0_i32_0 = arith.constant 0 : i32
    %c0_i32_1 = arith.constant 0 : i32
    return %c0_i32, %c0_i32_0 : i32, i32
  }
  func.func @transform_6(%arg0: i32) -> (i32, i32) {
    %c0_i32 = arith.constant 0 : i32
    %c0_i32_0 = arith.constant 0 : i32
    %c0_i32_1 = arith.constant 0 : i32
    return %c0_i32, %c0_i32_0 : i32, i32
  }
  func.func @transform_7(%arg0: i32) -> (i32, i32) {
    %c0_i32 = arith.constant 0 : i32
    %c0_i32_0 = arith.constant 0 : i32
    %c0_i32_1 = arith.constant 0 : i32
    return %c0_i32, %c0_i32_0 : i32, i32
  }
  func.func @transform_8(%arg0: i32) -> (i32, i32, i32) {
    %c0_i32 = arith.constant 0 : i32
    %c0_i32_0 = arith.constant 0 : i32
    %c0_i32_1 = arith.constant 0 : i32
    return %arg0, %c0_i32, %c0_i32_0 : i32, i32, i32
  }
}

</mosaic_0001>

<llo_original>
// kernel: _decoder_forward.1
$region0: #{_decoder_forward.1}
  #allocation0 [shape = 'u32[]', space=smem, size = 0x4, offset = 0x4, fixed_abs, tag = 'smem constant byte address 0x4 - core index']
  #allocation1 [shape = 'u32[72,128]{1,0:T(1,128)}', space=vmem, size = 0x9000, scoped, tag = 'internal scratch']
  #allocation2 [shape = 'f32[18,128]{1,0:T(8,128)}', space=vmem, size = 0x3000, scoped, tag = 'scratch operand']
  %s0 = inlined_call_operand.vmem [shape: f32[2,34,128], index: 0, kind: input, shape index: {}]
  %s1 = inlined_call_operand.vmem [shape: bf16[384,128], index: 1, kind: input, shape index: {}]
  %s2 = inlined_call_operand.vmem [shape: f32[1,128], index: 2, kind: input, shape index: {}]
  %s3 = inlined_call_operand.vmem [shape: f32[1,128], index: 3, kind: input, shape index: {}]
  %s4 = inlined_call_operand.vmem [shape: f32[1,128], index: 4, kind: input, shape index: {}]
  %s5 = inlined_call_operand.vmem [shape: bf16[384,64], index: 5, kind: input, shape index: {}]
  %s6 = inlined_call_operand.vmem [shape: f32[64,128], index: 6, kind: input, shape index: {}]
  %s7 = inlined_call_operand.vmem [shape: f32[1,128], index: 7, kind: input, shape index: {}]
  %s8 = inlined_call_operand.hbm [shape: f32[2,1,128], index: 8, kind: output, shape index: {}]
  %s9 = sld [smem:[#allocation0]]
  $region65: #{_decoder_forward.1} parent=0
    _
  %s11 = ssub.s32 1, %s9
  %s12 = scalar_select 0, %s11, %s9
  $region1: #{_decoder_forward.1} parent=0
    #allocation3 [shape = 'u8[1024]{0}', space=vmem, size = 0x400, scoped, tag = 'output window, operand 0']
    #allocation4 [shape = 's32[2]{0}', space=sflag, size = 0x8, scoped, tag = 'scoped memory for _decoder_forward.1']
    %13 = vsyncpa [#allocation4], 0
    %s14 = scalar_lea.sflag [#allocation4], 1
    %15 = vsyncpa %s14, 0
    loop: start=0, step=1, limit=4
    $region2: #{_decoder_forward.1} parent=1 // loop_pre_header
      _
    $region3: #{_decoder_forward.1} parent=1 // loop_header
      %s17 = sphi 0, %s21
      %p18 = scmp.ge.s32.totalorder %s17, 4
      %s27 = sphi 0, %s29
      %s30 = sphi 0, %s27
      %s31 = sphi 0, %s30
      %s47 = sphi 0, %s31
      %s51 = sphi 0, %s51
      %s53 = sphi 0, %s51
      %s54 = sphi 0, %s53
      %s68 = sphi 0, %s54
      %s72 = sphi 0, %s72
      %s74 = sphi 0, %s72
      %s75 = sphi 0, %s74
      %s89 = sphi 0, %s75
      %s93 = sphi 0, %s93
      %s95 = sphi 0, %s93
      %s96 = sphi 0, %s95
      %s110 = sphi 0, %s96
      %s114 = sphi 0, %s114
      %s116 = sphi 0, %s114
      %s117 = sphi 0, %s116
      %s131 = sphi 0, %s117
      %s135 = sphi 0, %s135
      %s137 = sphi 0, %s135
      %s138 = sphi 0, %s137
      %s152 = sphi 0, %s138
      %s156 = sphi 0, %s156
      %s158 = sphi 0, %s156
      %s159 = sphi 0, %s158
      %s173 = sphi 0, %s159
      %s177 = sphi 0, %s177
      %s179 = sphi 0, %s177
      %s180 = sphi 0, %s179
      %s194 = sphi 0, %s180
      %s200 = sphi 0, %s202
      %s203 = sphi 0, %s200
      %s204 = sphi 0, %s203
      %s220 = sphi 0, %s204
    $region4: #{_decoder_forward.1} parent=1 // loop_header_branch
      %20 = sbr.rel (%p18) target = $region8
    $region5: #{_decoder_forward.1} parent=1 // loop_body
      %s22 = ssub.s32 %s17, 1
      %s23 = ssub.s32 %s17, 2
      %s24 = sadd.s32 %s17, 1
      %s25 = ssub.s32 %s17, %s24
      %p26 = scmp.eq.s32.totalorder %s25, 0
      %s28 = sadd.s32 %s27, 1
      %s29 = scalar_select %p26, %s27, %s28
      %p32 = pneg %p26
      %p33 = scmp.eq.s32.totalorder %s17, 1
      %p34 = por %p32, %p33
      %p35 = scmp.ne.s32.totalorder %s27, %s30
      %p36 = scmp.eq.s32.totalorder %s17, 0
      %p37 = por %p35, %p36
      %p38 = scmp.ne.s32.totalorder %s27, %s30
      %p39 = scmp.eq.s32.totalorder %s22, 1
      %p40 = por %p38, %p39
      %p41 = scmp.ne.s32.totalorder %s30, %s31
      %p42 = scmp.eq.s32.totalorder %s22, 0
      %p43 = por %p41, %p42
      %p44 = scmp.ne.s32.totalorder %s30, %s31
      %p45 = scmp.eq.s32.totalorder %s23, 1
      %p46 = por %p44, %p45
      %p48 = scmp.ne.s32.totalorder %s31, %s47
      %p49 = scmp.eq.s32.totalorder %s23, 0
      %p50 = por %p48, %p49
      %s52 = sadd.s32 %s51, 1
      %p55 = scmp.eq.s32.totalorder %s17, 1
      %p56 = scmp.ne.s32.totalorder %s51, %s53
      %p57 = scmp.eq.s32.totalorder %s17, 0
      %p58 = por %p56, %p57
      %p59 = scmp.ne.s32.totalorder %s51, %s53
      %p60 = scmp.eq.s32.totalorder %s22, 1
      %p61 = por %p59, %p60
      %p62 = scmp.ne.s32.totalorder %s53, %s54
      %p63 = scmp.eq.s32.totalorder %s22, 0
      %p64 = por %p62, %p63
      %p65 = scmp.ne.s32.totalorder %s53, %s54
      %p66 = scmp.eq.s32.totalorder %s23, 1
      %p67 = por %p65, %p66
      %p69 = scmp.ne.s32.totalorder %s54, %s68
      %p70 = scmp.eq.s32.totalorder %s23, 0
      %p71 = por %p69, %p70
      %s73 = sadd.s32 %s72, 1
      %p76 = scmp.eq.s32.totalorder %s17, 1
      %p77 = scmp.ne.s32.totalorder %s72, %s74
      %p78 = scmp.eq.s32.totalorder %s17, 0
      %p79 = por %p77, %p78
      %p80 = scmp.ne.s32.totalorder %s72, %s74
      %p81 = scmp.eq.s32.totalorder %s22, 1
      %p82 = por %p80, %p81
      %p83 = scmp.ne.s32.totalorder %s74, %s75
      %p84 = scmp.eq.s32.totalorder %s22, 0
      %p85 = por %p83, %p84
      %p86 = scmp.ne.s32.totalorder %s74, %s75
      %p87 = scmp.eq.s32.totalorder %s23, 1
      %p88 = por %p86, %p87
      %p90 = scmp.ne.s32.totalorder %s75, %s89
      %p91 = scmp.eq.s32.totalorder %s23, 0
      %p92 = por %p90, %p91
      %s94 = sadd.s32 %s93, 1
      %p97 = scmp.eq.s32.totalorder %s17, 1
      %p98 = scmp.ne.s32.totalorder %s93, %s95
      %p99 = scmp.eq.s32.totalorder %s17, 0
      %p100 = por %p98, %p99
      %p101 = scmp.ne.s32.totalorder %s93, %s95
      %p102 = scmp.eq.s32.totalorder %s22, 1
      %p103 = por %p101, %p102
      %p104 = scmp.ne.s32.totalorder %s95, %s96
      %p105 = scmp.eq.s32.totalorder %s22, 0
      %p106 = por %p104, %p105
      %p107 = scmp.ne.s32.totalorder %s95, %s96
      %p108 = scmp.eq.s32.totalorder %s23, 1
      %p109 = por %p107, %p108
      %p111 = scmp.ne.s32.totalorder %s96, %s110
      %p112 = scmp.eq.s32.totalorder %s23, 0
      %p113 = por %p111, %p112
      %s115 = sadd.s32 %s114, 1
      %p118 = scmp.eq.s32.totalorder %s17, 1
      %p119 = scmp.ne.s32.totalorder %s114, %s116
      %p120 = scmp.eq.s32.totalorder %s17, 0
      %p121 = por %p119, %p120
      %p122 = scmp.ne.s32.totalorder %s114, %s116
      %p123 = scmp.eq.s32.totalorder %s22, 1
      %p124 = por %p122, %p123
      %p125 = scmp.ne.s32.totalorder %s116, %s117
      %p126 = scmp.eq.s32.totalorder %s22, 0
      %p127 = por %p125, %p126
      %p128 = scmp.ne.s32.totalorder %s116, %s117
      %p129 = scmp.eq.s32.totalorder %s23, 1
      %p130 = por %p128, %p129
      %p132 = scmp.ne.s32.totalorder %s117, %s131
      %p133 = scmp.eq.s32.totalorder %s23, 0
      %p134 = por %p132, %p133
      %s136 = sadd.s32 %s135, 1
      %p139 = scmp.eq.s32.totalorder %s17, 1
      %p140 = scmp.ne.s32.totalorder %s135, %s137
      %p141 = scmp.eq.s32.totalorder %s17, 0
      %p142 = por %p140, %p141
      %p143 = scmp.ne.s32.totalorder %s135, %s137
      %p144 = scmp.eq.s32.totalorder %s22, 1
      %p145 = por %p143, %p144
      %p146 = scmp.ne.s32.totalorder %s137, %s138
      %p147 = scmp.eq.s32.totalorder %s22, 0
      %p148 = por %p146, %p147
      %p149 = scmp.ne.s32.totalorder %s137, %s138
      %p150 = scmp.eq.s32.totalorder %s23, 1
      %p151 = por %p149, %p150
      %p153 = scmp.ne.s32.totalorder %s138, %s152
      %p154 = scmp.eq.s32.totalorder %s23, 0
      %p155 = por %p153, %p154
      %s157 = sadd.s32 %s156, 1
      %p160 = scmp.eq.s32.totalorder %s17, 1
      %p161 = scmp.ne.s32.totalorder %s156, %s158
      %p162 = scmp.eq.s32.totalorder %s17, 0
      %p163 = por %p161, %p162
      %p164 = scmp.ne.s32.totalorder %s156, %s158
      %p165 = scmp.eq.s32.totalorder %s22, 1
      %p166 = por %p164, %p165
      %p167 = scmp.ne.s32.totalorder %s158, %s159
      %p168 = scmp.eq.s32.totalorder %s22, 0
      %p169 = por %p167, %p168
      %p170 = scmp.ne.s32.totalorder %s158, %s159
      %p171 = scmp.eq.s32.totalorder %s23, 1
      %p172 = por %p170, %p171
      %p174 = scmp.ne.s32.totalorder %s159, %s173
      %p175 = scmp.eq.s32.totalorder %s23, 0
      %p176 = por %p174, %p175
      %s178 = sadd.s32 %s177, 1
      %p181 = scmp.eq.s32.totalorder %s17, 1
      %p182 = scmp.ne.s32.totalorder %s177, %s179
      %p183 = scmp.eq.s32.totalorder %s17, 0
      %p184 = por %p182, %p183
      %p185 = scmp.ne.s32.totalorder %s177, %s179
      %p186 = scmp.eq.s32.totalorder %s22, 1
      %p187 = por %p185, %p186
      %p188 = scmp.ne.s32.totalorder %s179, %s180
      %p189 = scmp.eq.s32.totalorder %s22, 0
      %p190 = por %p188, %p189
      %p191 = scmp.ne.s32.totalorder %s179, %s180
      %p192 = scmp.eq.s32.totalorder %s23, 1
      %p193 = por %p191, %p192
      %p195 = scmp.ne.s32.totalorder %s180, %s194
      %p196 = scmp.eq.s32.totalorder %s23, 0
      %p197 = por %p195, %p196
      %s198 = ssub.s32 %s17, %s24
      %p199 = scmp.eq.s32.totalorder %s198, 0
      %s201 = sadd.s32 %s200, 1
      %s202 = scalar_select %p199, %s200, %s201
      %p205 = pneg %p199
      %p206 = scmp.eq.s32.totalorder %s17, 1
      %p207 = por %p205, %p206
      %p208 = scmp.ne.s32.totalorder %s200, %s203
      %p209 = scmp.eq.s32.totalorder %s17, 0
      %p210 = por %p208, %p209
      %p211 = scmp.ne.s32.totalorder %s200, %s203
      %p212 = scmp.eq.s32.totalorder %s22, 1
      %p213 = por %p211, %p212
      %p214 = scmp.ne.s32.totalorder %s203, %s204
      %p215 = scmp.eq.s32.totalorder %s22, 0
      %p216 = por %p214, %p215
      %p217 = scmp.ne.s32.totalorder %s203, %s204
      %p218 = scmp.eq.s32.totalorder %s23, 1
      %p219 = por %p217, %p218
      %p221 = scmp.ne.s32.totalorder %s204, %s220
      %p222 = scmp.eq.s32.totalorder %s23, 0
      %p223 = por %p221, %p222
      %p224 = scmp.le.s32.totalorder 1, %s17
      %p225 = scmp.lt.s32.totalorder %s17, 3
      %p226 = pnand %p224, %p225
      %p227 = pneg %p226
      // Predicated region
      $region9: #{_decoder_forward.1} parent=5 // pred_check
        _
      $region10: #{_decoder_forward.1} parent=5 // pred_check_branch
        %229 = sbr.rel (%p226) target = $region12
      $region11: #{_decoder_forward.1} parent=5 // pred_region
        %s230 = ssub.s32 %s17, 1
        // Predicated region
        $region13: #{_decoder_forward.1} parent=11 // pred_check
          %p231 = pneg %p64
        $region14: #{_decoder_forward.1} parent=11 // pred_check_branch
          %233 = sbr.rel (%p231) target = $region16
        $region15: #{_decoder_forward.1} parent=11 // pred_region
          _
        $region16: #{_decoder_forward.1} parent=11 // pred_fallthru
          _
        // Predicated region
        $region17: #{_decoder_forward.1} parent=11 // pred_check
          %p234 = pneg %p85
        $region18: #{_decoder_forward.1} parent=11 // pred_check_branch
          %236 = sbr.rel (%p234) target = $region20
        $region19: #{_decoder_forward.1} parent=11 // pred_region
          _
        $region20: #{_decoder_forward.1} parent=11 // pred_fallthru
          _
        // Predicated region
        $region21: #{_decoder_forward.1} parent=11 // pred_check
          %p237 = pneg %p106
        $region22: #{_decoder_forward.1} parent=11 // pred_check_branch
          %239 = sbr.rel (%p237) target = $region24
        $region23: #{_decoder_forward.1} parent=11 // pred_region
          _
        $region24: #{_decoder_forward.1} parent=11 // pred_fallthru
          _
        // Predicated region
        $region25: #{_decoder_forward.1} parent=11 // pred_check
          %p240 = pneg %p127
        $region26: #{_decoder_forward.1} parent=11 // pred_check_branch
          %242 = sbr.rel (%p240) target = $region28
        $region27: #{_decoder_forward.1} parent=11 // pred_region
          _
        $region28: #{_decoder_forward.1} parent=11 // pred_fallthru
          _
        // Predicated region
        $region29: #{_decoder_forward.1} parent=11 // pred_check
          %p243 = pneg %p148
        $region30: #{_decoder_forward.1} parent=11 // pred_check_branch
          %245 = sbr.rel (%p243) target = $region32
        $region31: #{_decoder_forward.1} parent=11 // pred_region
          _
        $region32: #{_decoder_forward.1} parent=11 // pred_fallthru
          _
        // Predicated region
        $region33: #{_decoder_forward.1} parent=11 // pred_check
          %p246 = pneg %p169
        $region34: #{_decoder_forward.1} parent=11 // pred_check_branch
          %248 = sbr.rel (%p246) target = $region36
        $region35: #{_decoder_forward.1} parent=11 // pred_region
          _
        $region36: #{_decoder_forward.1} parent=11 // pred_fallthru
          _
        // Predicated region
        $region37: #{_decoder_forward.1} parent=11 // pred_check
          %p249 = pneg %p190
        $region38: #{_decoder_forward.1} parent=11 // pred_check_branch
          %251 = sbr.rel (%p249) target = $region40
        $region39: #{_decoder_forward.1} parent=11 // pred_region
          _
        $region40: #{_decoder_forward.1} parent=11 // pred_fallthru
          _
      $region12: #{_decoder_forward.1} parent=5 // pred_fallthru
        _
      %p252 = scmp.lt.s32.totalorder %s17, 2
      // Predicated region
      $region41: #{_decoder_forward.1} parent=5 // pred_check
        %p253 = pneg %p252
      $region42: #{_decoder_forward.1} parent=5 // pred_check_branch
        %255 = sbr.rel (%p253) target = $region44
      $region43: #{_decoder_forward.1} parent=5 // pred_region
        // Predicated region
        $region45: #{_decoder_forward.1} parent=43 // pred_check
          %p256 = pneg %p37
        $region46: #{_decoder_forward.1} parent=43 // pred_check_branch
          %258 = sbr.rel (%p256) target = $region48
        $region47: #{_decoder_forward.1} parent=43 // pred_region
          %p259 = scmp.lt.s32.totalorder %s17, 1
          %s260 = scalar_select %p259, %s17, 1
          %s261 = smul.addr %s260, 5
          %s262 = smul.addr %s261, 8
          %s263 = scalar_lea.vmem %s0, %s262
        $region48: #{_decoder_forward.1} parent=43 // pred_fallthru
          _
      $region44: #{_decoder_forward.1} parent=5 // pred_fallthru
        _
      %p264 = scmp.le.s32.totalorder 1, %s17
      %p265 = scmp.lt.s32.totalorder %s17, 3
      %p266 = pnand %p264, %p265
      %p267 = pneg %p266
      // Predicated region
      $region49: #{_decoder_forward.1} parent=5 // pred_check
        _
      $region50: #{_decoder_forward.1} parent=5 // pred_check_branch
        %269 = sbr.rel (%p266) target = $region52
      $region51: #{_decoder_forward.1} parent=5 // pred_region
        %s270 = ssub.s32 %s17, 1
        %p271 = scmp.lt.s32.totalorder %s22, 1
        %s272 = scalar_select %p271, %s22, 1
        %s273 = smul.addr %s272, 5
        %s274 = smul.addr %s273, 8
        %s275 = scalar_lea.vmem %s0, %s274
        %p276 = pneg %p43
        %p277 = pneg %p40
        %p278 = pneg %p64
        %p279 = pneg %p61
        %p280 = pneg %p85
        %p281 = pneg %p82
        %p282 = pneg %p106
        %p283 = pneg %p103
        %p284 = pneg %p127
        %p285 = pneg %p124
        %p286 = pneg %p148
        %p287 = pneg %p145
        %p288 = pneg %p169
        %p289 = pneg %p166
        %p290 = pneg %p190
        %p291 = pneg %p187
        %p292 = pneg %p216
        %p293 = pneg %p213
        %s294 = sand.u32 %s203, 1
        %s295 = scalar_lea.sflag [#allocation4], %s294
        %s296 = sand.u32 %s203, 1
        %s297 = scalar_lea.vmem [#allocation3], %s296
        %p298 = scmp.lt.s32.totalorder %s22, 1
        %s299 = scalar_select %p298, %s22, 1
        %s300 = smul.addr %s299, 5
        %s301 = smul.addr %s300, 8
        %s302 = scalar_lea.vmem %s0, %s301
        %v303 = vld [vmem:[%s302] ss:$2 sm:$0xff]
        %s304 = scalar_lea.vmem %s302, 16
        %v305 = vld [vmem:[%s304] ss:$2 sm:$0xff]
        %s306 = scalar_lea.vmem %s302, 1
        %v307 = vld [vmem:[%s306] ss:$2 sm:$0xff]
        %s308 = scalar_lea.vmem %s302, 17
        %v309 = vld [vmem:[%s308] ss:$2 sm:$0xff]
        %s310 = scalar_lea.vmem %s302, 2
        %v311 = vld [vmem:[%s310] ss:$2 sm:$0xff]
        %s312 = scalar_lea.vmem %s302, 18
        %v313 = vld [vmem:[%s312] ss:$2 sm:$0xff]
        %v314 = vpack.c.bf16 %v305, %v303
        %v315 = vpack.c.bf16 %v309, %v307
        %v316 = vpack.c.bf16 %v313, %v311
        %v317 = vld [vmem:[%s1] sm:$0xf]
        %v318 = vld [vmem:[%s1 + $0x4] sm:$0xf]
        %v319 = vld [vmem:[%s1 + $0x8] sm:$0xf]
        %v320 = vld [vmem:[%s1 + $0xc] sm:$0xf]
        %v321 = vld [vmem:[%s1 + $0x10] sm:$0xf]
        %v322 = vld [vmem:[%s1 + $0x14] sm:$0xf]
        %v323 = vld [vmem:[%s1 + $0x18] sm:$0xf]
        %v324 = vld [vmem:[%s1 + $0x1c] sm:$0xf]
        %v325 = vld [vmem:[%s1 + $0x20] sm:$0xf]
        %v326 = vld [vmem:[%s1 + $0x24] sm:$0xf]
        %v327 = vld [vmem:[%s1 + $0x28] sm:$0xf]
        %v328 = vld [vmem:[%s1 + $0x2c] sm:$0xf]
        %v329 = vld [vmem:[%s1 + $0x30] sm:$0xf]
        %v330 = vld [vmem:[%s1 + $0x34] sm:$0xf]
        %v331 = vld [vmem:[%s1 + $0x38] sm:$0xf]
        %v332 = vld [vmem:[%s1 + $0x3c] sm:$0xf]
        %v333 = vld [vmem:[%s1 + $0x40] sm:$0xf]
        %v334 = vld [vmem:[%s1 + $0x44] sm:$0xf]
        %v335 = vld [vmem:[%s1 + $0x48] sm:$0xf]
        %v336 = vld [vmem:[%s1 + $0x4c] sm:$0xf]
        %v337 = vld [vmem:[%s1 + $0x50] sm:$0xf]
        %v338 = vld [vmem:[%s1 + $0x54] sm:$0xf]
        %v339 = vld [vmem:[%s1 + $0x58] sm:$0xf]
        %v340 = vld [vmem:[%s1 + $0x5c] sm:$0xf]
        %v341 = vld [vmem:[%s1 + $0x60] sm:$0xf]
        %v342 = vld [vmem:[%s1 + $0x64] sm:$0xf]
        %v343 = vld [vmem:[%s1 + $0x68] sm:$0xf]
        %v344 = vld [vmem:[%s1 + $0x6c] sm:$0xf]
        %v345 = vld [vmem:[%s1 + $0x70] sm:$0xf]
        %v346 = vld [vmem:[%s1 + $0x74] sm:$0xf]
        %v347 = vld [vmem:[%s1 + $0x78] sm:$0xf]
        %v348 = vld [vmem:[%s1 + $0x7c] sm:$0xf]
        %v349 = vld [vmem:[%s1 + $0x80] sm:$0xf]
        %v350 = vld [vmem:[%s1 + $0x84] sm:$0xf]
        %v351 = vld [vmem:[%s1 + $0x88] sm:$0xf]
        %v352 = vld [vmem:[%s1 + $0x8c] sm:$0xf]
        %v353 = vld [vmem:[%s1 + $0x90] sm:$0xf]
        %v354 = vld [vmem:[%s1 + $0x94] sm:$0xf]
        %v355 = vld [vmem:[%s1 + $0x98] sm:$0xf]
        %v356 = vld [vmem:[%s1 + $0x9c] sm:$0xf]
        %v357 = vld [vmem:[%s1 + $0xa0] sm:$0xf]
        %v358 = vld [vmem:[%s1 + $0xa4] sm:$0xf]
        %v359 = vld [vmem:[%s1 + $0xa8] sm:$0xf]
        %v360 = vld [vmem:[%s1 + $0xac] sm:$0xf]
        %v361 = vld [vmem:[%s1 + $0xb0] sm:$0xf]
        %v362 = vld [vmem:[%s1 + $0xb4] sm:$0xf]
        %v363 = vld [vmem:[%s1 + $0xb8] sm:$0xf]
        %v364 = vld [vmem:[%s1 + $0xbc] sm:$0xf]
        %v365 = vld [vmem:[%s2] sm:$0x1]
        %v367 = vperm.slane %v365, 0
        %v417 = vunpack.c.l.b16 %v317
        %v418 = vunpack.c.l.b16 %v318
        %v419 = vunpack.c.l.b16 %v319
        %v420 = vunpack.c.l.b16 %v320
        %v421 = vunpack.c.l.b16 %v321
        %v422 = vunpack.c.l.b16 %v322
        %v423 = vunpack.c.l.b16 %v323
        %v424 = vunpack.c.l.b16 %v324
        %v425 = vunpack.c.l.b16 %v325
        %v426 = vunpack.c.l.b16 %v326
        %v427 = vunpack.c.l.b16 %v327
        %v428 = vunpack.c.l.b16 %v328
        %v429 = vunpack.c.l.b16 %v329
        %v430 = vunpack.c.l.b16 %v330
        %v431 = vunpack.c.l.b16 %v331
        %v432 = vunpack.c.l.b16 %v332
        %v433 = vunpack.c.l.b16 %v333
        %v434 = vunpack.c.l.b16 %v334
        %v435 = vunpack.c.l.b16 %v335
        %v436 = vunpack.c.l.b16 %v336
        %v437 = vunpack.c.l.b16 %v337
        %v438 = vunpack.c.l.b16 %v338
        %v439 = vunpack.c.l.b16 %v339
        %v440 = vunpack.c.l.b16 %v340
        %v441 = vunpack.c.l.b16 %v341
        %v442 = vunpack.c.l.b16 %v342
        %v443 = vunpack.c.l.b16 %v343
        %v444 = vunpack.c.l.b16 %v344
        %v445 = vunpack.c.l.b16 %v345
        %v446 = vunpack.c.l.b16 %v346
        %v447 = vunpack.c.l.b16 %v347
        %v448 = vunpack.c.l.b16 %v348
        %v449 = vunpack.c.l.b16 %v349
        %v450 = vunpack.c.l.b16 %v350
        %v451 = vunpack.c.l.b16 %v351
        %v452 = vunpack.c.l.b16 %v352
        %v453 = vunpack.c.l.b16 %v353
        %v454 = vunpack.c.l.b16 %v354
        %v455 = vunpack.c.l.b16 %v355
        %v456 = vunpack.c.l.b16 %v356
        %v457 = vunpack.c.l.b16 %v357
        %v458 = vunpack.c.l.b16 %v358
        %v459 = vunpack.c.l.b16 %v359
        %v460 = vunpack.c.l.b16 %v360
        %v461 = vunpack.c.l.b16 %v361
        %v462 = vunpack.c.l.b16 %v362
        %v463 = vunpack.c.l.b16 %v363
        %v464 = vunpack.c.l.b16 %v364
        %v465 = vpack.c.b16 %v418, %v417
        %v466 = vpack.c.b16 %v420, %v419
        %v467 = vpack.c.b16 %v422, %v421
        %v468 = vpack.c.b16 %v424, %v423
        %v469 = vpack.c.b16 %v426, %v425
        %v470 = vpack.c.b16 %v428, %v427
        %v471 = vpack.c.b16 %v430, %v429
        %v472 = vpack.c.b16 %v432, %v431
        %v473 = vpack.c.b16 %v434, %v433
        %v474 = vpack.c.b16 %v436, %v435
        %v475 = vpack.c.b16 %v438, %v437
        %v476 = vpack.c.b16 %v440, %v439
        %v477 = vpack.c.b16 %v442, %v441
        %v478 = vpack.c.b16 %v444, %v443
        %v479 = vpack.c.b16 %v446, %v445
        %v480 = vpack.c.b16 %v448, %v447
        %v481 = vpack.c.b16 %v450, %v449
        %v482 = vpack.c.b16 %v452, %v451
        %v483 = vpack.c.b16 %v454, %v453
        %v484 = vpack.c.b16 %v456, %v455
        %v485 = vpack.c.b16 %v458, %v457
        %v486 = vpack.c.b16 %v460, %v459
        %v487 = vpack.c.b16 %v462, %v461
        %v488 = vpack.c.b16 %v464, %v463
        %513 = vmatpush.bf16.msra.mxu0 %v472
        %514 = vmatpush.bf16.msra.mxu0 %v471
        %515 = vmatpush.bf16.msra.mxu0 %v470
        %516 = vmatpush.bf16.msra.mxu0 %v469
        %517 = vmatpush.bf16.msra.mxu0 %v468
        %518 = vmatpush.bf16.msra.mxu0 %v467
        %519 = vmatpush.bf16.msra.mxu0 %v466
        %520 = vmatpush.bf16.msra.mxu0 %v465
        %521 = vmatmul.bf16.gmra.mxu0 %v314
        %v522 = vpop.f32.mrf.mxu0
        %v523 = vadd.f32 %v367, %v522
        %v524 = vpop.f32.mrf.mxu0
        %v525 = vadd.f32 %v367, %v524
        %526 = vdwg.mxu0
        %527 = vmatpush.bf16.msra.mxu0 %v480
        %528 = vmatpush.bf16.msra.mxu0 %v479
        %529 = vmatpush.bf16.msra.mxu0 %v478
        %530 = vmatpush.bf16.msra.mxu0 %v477
        %531 = vmatpush.bf16.msra.mxu0 %v476
        %532 = vmatpush.bf16.msra.mxu0 %v475
        %533 = vmatpush.bf16.msra.mxu0 %v474
        %534 = vmatpush.bf16.msra.mxu0 %v473
        %535 = vmatmul.bf16.gmra.mxu0 %v315
        %v536 = vpop.f32.mrf.mxu0
        %v537 = vadd.f32 %v523, %v536
        %v538 = vpop.f32.mrf.mxu0
        %v539 = vadd.f32 %v525, %v538
        %540 = vdwg.mxu0
        %541 = vmatpush.bf16.msra.mxu0 %v488
        %542 = vmatpush.bf16.msra.mxu0 %v487
        %543 = vmatpush.bf16.msra.mxu0 %v486
        %544 = vmatpush.bf16.msra.mxu0 %v485
        %545 = vmatpush.bf16.msra.mxu0 %v484
        %546 = vmatpush.bf16.msra.mxu0 %v483
        %547 = vmatpush.bf16.msra.mxu0 %v482
        %548 = vmatpush.bf16.msra.mxu0 %v481
        %549 = vmatmul.bf16.gmra.mxu0 %v316
        %v550 = vpop.f32.mrf.mxu0
        %v551 = vadd.f32 %v537, %v550
        %v552 = vpop.f32.mrf.mxu0
        %v553 = vadd.f32 %v539, %v552
        %554 = vdwg.mxu0
        %v555 = vld [vmem:[%s3] sm:$0x1]
        %v557 = vperm.slane %v555, 0
        %v559 = vmul.f32 %v551, %v557
        %v560 = vmul.f32 %v553, %v557
        %v561 = vld [vmem:[%s4] sm:$0x1]
        %v563 = vperm.slane %v561, 0
        %v565 = vadd.f32 %v559, %v563
        %v566 = vadd.f32 %v560, %v563
        %v567 = vmax.f32 %v565, 0.0
        %v568 = vmax.f32 %v566, 0.0
        %v569 = vadd.f32 %v567, %v551
        %v570 = vadd.f32 %v568, %v553
        %571 = vst [vmem:[#allocation2 + $0x1] sm:$0xff] %v569
        %572 = vst [vmem:[#allocation2 + $0x9] sm:$0xff] %v570
        %573 = vst [vmem:[#allocation2] sm:$0x1] %v569
        %574 = vst [vmem:[#allocation2 + $0xa] sm:$0x80] %v570
        %v575 = vld [vmem:[#allocation2] ss:$2 sm:$0xff]
        %s576 = scalar_lea.vmem [#allocation2], 1
        %v577 = vld [vmem:[%s576] ss:$2 sm:$0xff]
        %s578 = scalar_lea.vmem [#allocation2], 2
        %v579 = vld [vmem:[%s578] ss:$2 sm:$0xff]
        %v580 = vpack.c.bf16 %v575, %v575
        %v581 = vpack.c.bf16 %v577, %v577
        %v582 = vpack.c.bf16 %v579, %v579
        %v583 = vld [vmem:[%s5] sm:$0xf]
        %v584 = vld [vmem:[%s5 + $0x4] sm:$0xf]
        %v585 = vld [vmem:[%s5 + $0x8] sm:$0xf]
        %v586 = vld [vmem:[%s5 + $0xc] sm:$0xf]
        %v587 = vld [vmem:[%s5 + $0x10] sm:$0xf]
        %v588 = vld [vmem:[%s5 + $0x14] sm:$0xf]
        %v589 = vld [vmem:[%s5 + $0x18] sm:$0xf]
        %v590 = vld [vmem:[%s5 + $0x1c] sm:$0xf]
        %v591 = vld [vmem:[%s5 + $0x20] sm:$0xf]
        %v592 = vld [vmem:[%s5 + $0x24] sm:$0xf]
        %v593 = vld [vmem:[%s5 + $0x28] sm:$0xf]
        %v594 = vld [vmem:[%s5 + $0x2c] sm:$0xf]
        %v595 = vld [vmem:[%s5 + $0x30] sm:$0xf]
        %v596 = vld [vmem:[%s5 + $0x34] sm:$0xf]
        %v597 = vld [vmem:[%s5 + $0x38] sm:$0xf]
        %v598 = vld [vmem:[%s5 + $0x3c] sm:$0xf]
        %v599 = vld [vmem:[%s5 + $0x40] sm:$0xf]
        %v600 = vld [vmem:[%s5 + $0x44] sm:$0xf]
        %v601 = vld [vmem:[%s5 + $0x48] sm:$0xf]
        %v602 = vld [vmem:[%s5 + $0x4c] sm:$0xf]
        %v603 = vld [vmem:[%s5 + $0x50] sm:$0xf]
        %v604 = vld [vmem:[%s5 + $0x54] sm:$0xf]
        %v605 = vld [vmem:[%s5 + $0x58] sm:$0xf]
        %v606 = vld [vmem:[%s5 + $0x5c] sm:$0xf]
        %v607 = vld [vmem:[%s5 + $0x60] sm:$0xf]
        %v608 = vld [vmem:[%s5 + $0x64] sm:$0xf]
        %v609 = vld [vmem:[%s5 + $0x68] sm:$0xf]
        %v610 = vld [vmem:[%s5 + $0x6c] sm:$0xf]
        %v611 = vld [vmem:[%s5 + $0x70] sm:$0xf]
        %v612 = vld [vmem:[%s5 + $0x74] sm:$0xf]
        %v613 = vld [vmem:[%s5 + $0x78] sm:$0xf]
        %v614 = vld [vmem:[%s5 + $0x7c] sm:$0xf]
        %v615 = vld [vmem:[%s5 + $0x80] sm:$0xf]
        %v616 = vld [vmem:[%s5 + $0x84] sm:$0xf]
        %v617 = vld [vmem:[%s5 + $0x88] sm:$0xf]
        %v618 = vld [vmem:[%s5 + $0x8c] sm:$0xf]
        %v619 = vld [vmem:[%s5 + $0x90] sm:$0xf]
        %v620 = vld [vmem:[%s5 + $0x94] sm:$0xf]
        %v621 = vld [vmem:[%s5 + $0x98] sm:$0xf]
        %v622 = vld [vmem:[%s5 + $0x9c] sm:$0xf]
        %v623 = vld [vmem:[%s5 + $0xa0] sm:$0xf]
        %v624 = vld [vmem:[%s5 + $0xa4] sm:$0xf]
        %v625 = vld [vmem:[%s5 + $0xa8] sm:$0xf]
        %v626 = vld [vmem:[%s5 + $0xac] sm:$0xf]
        %v627 = vld [vmem:[%s5 + $0xb0] sm:$0xf]
        %v628 = vld [vmem:[%s5 + $0xb4] sm:$0xf]
        %v629 = vld [vmem:[%s5 + $0xb8] sm:$0xf]
        %v630 = vld [vmem:[%s5 + $0xbc] sm:$0xf]
        %v679 = vunpack.c.l.b16 %v583
        %v680 = vunpack.c.l.b16 %v584
        %v681 = vunpack.c.l.b16 %v585
        %v682 = vunpack.c.l.b16 %v586
        %v683 = vunpack.c.l.b16 %v587
        %v684 = vunpack.c.l.b16 %v588
        %v685 = vunpack.c.l.b16 %v589
        %v686 = vunpack.c.l.b16 %v590
        %v687 = vunpack.c.l.b16 %v591
        %v688 = vunpack.c.l.b16 %v592
        %v689 = vunpack.c.l.b16 %v593
        %v690 = vunpack.c.l.b16 %v594
        %v691 = vunpack.c.l.b16 %v595
        %v692 = vunpack.c.l.b16 %v596
        %v693 = vunpack.c.l.b16 %v597
        %v694 = vunpack.c.l.b16 %v598
        %v695 = vunpack.c.l.b16 %v599
        %v696 = vunpack.c.l.b16 %v600
        %v697 = vunpack.c.l.b16 %v601
        %v698 = vunpack.c.l.b16 %v602
        %v699 = vunpack.c.l.b16 %v603
        %v700 = vunpack.c.l.b16 %v604
        %v701 = vunpack.c.l.b16 %v605
        %v702 = vunpack.c.l.b16 %v606
        %v703 = vunpack.c.l.b16 %v607
        %v704 = vunpack.c.l.b16 %v608
        %v705 = vunpack.c.l.b16 %v609
        %v706 = vunpack.c.l.b16 %v610
        %v707 = vunpack.c.l.b16 %v611
        %v708 = vunpack.c.l.b16 %v612
        %v709 = vunpack.c.l.b16 %v613
        %v710 = vunpack.c.l.b16 %v614
        %v711 = vunpack.c.l.b16 %v615
        %v712 = vunpack.c.l.b16 %v616
        %v713 = vunpack.c.l.b16 %v617
        %v714 = vunpack.c.l.b16 %v618
        %v715 = vunpack.c.l.b16 %v619
        %v716 = vunpack.c.l.b16 %v620
        %v717 = vunpack.c.l.b16 %v621
        %v718 = vunpack.c.l.b16 %v622
        %v719 = vunpack.c.l.b16 %v623
        %v720 = vunpack.c.l.b16 %v624
        %v721 = vunpack.c.l.b16 %v625
        %v722 = vunpack.c.l.b16 %v626
        %v723 = vunpack.c.l.b16 %v627
        %v724 = vunpack.c.l.b16 %v628
        %v725 = vunpack.c.l.b16 %v629
        %v726 = vunpack.c.l.b16 %v630
        %v727 = vpack.c.b16 %v680, %v679
        %v728 = vpack.c.b16 %v682, %v681
        %v729 = vpack.c.b16 %v684, %v683
        %v730 = vpack.c.b16 %v686, %v685
        %v731 = vpack.c.b16 %v688, %v687
        %v732 = vpack.c.b16 %v690, %v689
        %v733 = vpack.c.b16 %v692, %v691
        %v734 = vpack.c.b16 %v694, %v693
        %v735 = vpack.c.b16 %v696, %v695
        %v736 = vpack.c.b16 %v698, %v697
        %v737 = vpack.c.b16 %v700, %v699
        %v738 = vpack.c.b16 %v702, %v701
        %v739 = vpack.c.b16 %v704, %v703
        %v740 = vpack.c.b16 %v706, %v705
        %v741 = vpack.c.b16 %v708, %v707
        %v742 = vpack.c.b16 %v710, %v709
        %v743 = vpack.c.b16 %v712, %v711
        %v744 = vpack.c.b16 %v714, %v713
        %v745 = vpack.c.b16 %v716, %v715
        %v746 = vpack.c.b16 %v718, %v717
        %v747 = vpack.c.b16 %v720, %v719
        %v748 = vpack.c.b16 %v722, %v721
        %v749 = vpack.c.b16 %v724, %v723
        %v750 = vpack.c.b16 %v726, %v725
        %775 = vmatpush.bf16.msra.mxu0 %v734
        %776 = vmatpush.bf16.msra.mxu0 %v733
        %777 = vmatpush.bf16.msra.mxu0 %v732
        %778 = vmatpush.bf16.msra.mxu0 %v731
        %779 = vmatpush.bf16.msra.mxu0 %v730
        %780 = vmatpush.bf16.msra.mxu0 %v729
        %781 = vmatpush.bf16.msra.mxu0 %v728
        %782 = vmatpush.bf16.msra.mxu0 %v727
        %783 = vmatmul.bf16.gmra.mxu0 %v580
        %v784 = vpop.f32.mrf.mxu0
        %v785 = vadd.f32 0.0, %v784
        %v786 = vpop.f32.mrf.mxu0
        %787 = vdwg.mxu0
        %788 = vmatpush.bf16.msra.mxu0 %v742
        %789 = vmatpush.bf16.msra.mxu0 %v741
        %790 = vmatpush.bf16.msra.mxu0 %v740
        %791 = vmatpush.bf16.msra.mxu0 %v739
        %792 = vmatpush.bf16.msra.mxu0 %v738
        %793 = vmatpush.bf16.msra.mxu0 %v737
        %794 = vmatpush.bf16.msra.mxu0 %v736
        %795 = vmatpush.bf16.msra.mxu0 %v735
        %796 = vmatmul.bf16.gmra.mxu0 %v581
        %v797 = vpop.f32.mrf.mxu0
        %v798 = vadd.f32 %v785, %v797
        %v799 = vpop.f32.mrf.mxu0
        %800 = vdwg.mxu0
        %801 = vmatpush.bf16.msra.mxu0 %v750
        %802 = vmatpush.bf16.msra.mxu0 %v749
        %803 = vmatpush.bf16.msra.mxu0 %v748
        %804 = vmatpush.bf16.msra.mxu0 %v747
        %805 = vmatpush.bf16.msra.mxu0 %v746
        %806 = vmatpush.bf16.msra.mxu0 %v745
        %807 = vmatpush.bf16.msra.mxu0 %v744
        %808 = vmatpush.bf16.msra.mxu0 %v743
        %809 = vmatmul.bf16.gmra.mxu0 %v582
        %v810 = vpop.f32.mrf.mxu0
        %v811 = vadd.f32 %v798, %v810
        %v812 = vpop.f32.mrf.mxu0
        %813 = vdwg.mxu0
        %vm814 = vcmask 523264
        %v815 = vsel %vm814, %v811, 0.0
        %v816 = vrot.slane %v815, 4
        %v817 = vadd.f32 %v815, %v816
        %v818 = vrot.slane %v817, 2
        %v819 = vadd.f32 %v817, %v818
        %v820 = vrot.slane %v819, 1
        %v821 = vadd.f32 %v819, %v820
        %v822 = vld [vmem:[%s6] sm:$0xff]
        %v823 = vld [vmem:[%s6 + $0x8] sm:$0xff]
        %v824 = vld [vmem:[%s6 + $0x10] sm:$0xff]
        %v825 = vld [vmem:[%s6 + $0x18] sm:$0xff]
        %v826 = vld [vmem:[%s6 + $0x20] sm:$0xff]
        %v827 = vld [vmem:[%s6 + $0x28] sm:$0xff]
        %v828 = vld [vmem:[%s6 + $0x30] sm:$0xff]
        %v829 = vld [vmem:[%s6 + $0x38] sm:$0xff]
        %v830 = vld [vmem:[%s7] sm:$0x1]
        %v832 = vsel %vm814, %v821, 0
        %834 = vmatpush.msra.mxu0 0.0
        %835 = vmatpush.msra.mxu0 0.0
        %836 = vmatpush.msra.mxu0 0.0
        %837 = vmatpush.msra.mxu0 0.0
        %838 = vmatpush.msra.mxu0 0.0
        %839 = vmatpush.msra.mxu0 0.0
        %840 = vmatpush.msra.mxu0 0.0
        %841 = vmatpush.msra.mxu0 0.0
        %842 = vmatpush.msra.mxu0 %v829
        %843 = vmatpush.msra.mxu0 %v828
        %844 = vmatpush.msra.mxu0 %v827
        %845 = vmatpush.msra.mxu0 %v826
        %846 = vmatpush.msra.mxu0 %v825
        %847 = vmatpush.msra.mxu0 %v824
        %848 = vmatpush.msra.mxu0 %v823
        %849 = vmatpush.msra.mxu0 %v822
        %850 = vmatmul.f32.gmra.mxu0 %v832
        %v851 = vpop.f32.mrf.mxu0
        %v852 = vadd.f32 %v830, %v851
        %853 = vdwg.mxu0
        %854 = vst [vmem:[%s297] sm:$0x1] %v852
        %s855 = sand.u32 %s203, 1
        %s856 = scalar_lea.sflag [#allocation4], %s855
        %s857 = sand.u32 %s203, 1
        %s858 = scalar_lea.vmem [#allocation3], %s857
        // Predicated region
        $region53: #{_decoder_forward.1} parent=51 // pred_check
          %p859 = pneg %p213
        $region54: #{_decoder_forward.1} parent=51 // pred_check_branch
          %861 = sbr.rel (%p859) target = $region56
        $region55: #{_decoder_forward.1} parent=51 // pred_region
          %863 = vsyncadd %s856, 0
          %s864 = scalar_lea.hbm %s8, %s22
          %s866 = sshll.u32 %s858, 4
          %s867 = int_to_ptr.vmem [resolvable:$true] %s866
          %s868 = sshll.u32 %s864, 4
          %s869 = int_to_ptr.hbm [resolvable:$true] %s868
          %871 = dma.vmem_to_hbm [thread:$0]  %s867, 16, %s869, %s856
        $region56: #{_decoder_forward.1} parent=51 // pred_fallthru
          _
      $region52: #{_decoder_forward.1} parent=5 // pred_fallthru
        _
      %p872 = scmp.le.s32.totalorder 2, %s17
      // Predicated region
      $region57: #{_decoder_forward.1} parent=5 // pred_check
        %p873 = pneg %p872
      $region58: #{_decoder_forward.1} parent=5 // pred_check_branch
        %875 = sbr.rel (%p873) target = $region60
      $region59: #{_decoder_forward.1} parent=5 // pred_region
        %s876 = ssub.s32 %s17, 2
        // Predicated region
        $region61: #{_decoder_forward.1} parent=59 // pred_check
          %p877 = pneg %p219
        $region62: #{_decoder_forward.1} parent=59 // pred_check_branch
          %879 = sbr.rel (%p877) target = $region64
        $region63: #{_decoder_forward.1} parent=59 // pred_region
          %s880 = sand.u32 %s204, 1
          %s881 = scalar_lea.sflag [#allocation4], %s880
          %s882 = sand.u32 %s204, 1
          %s883 = scalar_lea.vmem [#allocation3], %s882
          %885 = dma.done %s881, 16
        $region64: #{_decoder_forward.1} parent=59 // pred_fallthru
          _
      $region60: #{_decoder_forward.1} parent=5 // pred_fallthru
        _
    $region6: #{_decoder_forward.1} parent=1 // loop_footer
      %s21 = sadd.s32 1, %s17
    $region7: #{_decoder_forward.1} parent=1 // loop_footer_branch
      %16 = sbr.rel target = $region3
    $region8: #{_decoder_forward.1} parent=1 // loop_exit
      _
    %886 = vsyncpa [#allocation4], 1
    %s887 = scalar_lea.sflag [#allocation4], 1
    %888 = vsyncpa %s887, 1

</llo_original>
